<compile_context>
chip_gen: v7x
topology: tpu7x:2x2x1
jax: 0.10.0
libtpu: 0.0.40
codegen_flags: <defaults>
</compile_context>

<pallas_src>
import jax
import jax.numpy as jnp
from jax.experimental import pallas as pl
from jax.experimental.pallas import tpu as pltpu


def _round_up(x: int, m: int) -> int:
    return ((x + m - 1) // m) * m


def _fusion_fc_kernel(o1_ref, o2_ref, o3_ref, w1_ref, w2_ref, w3_ref, b_ref,
                      out_ref):
    """One batch tile of: cat([o1, o2, o3], dim=1) @ W.T + b.

    Inputs stay in their native dtype in HBM/VMEM and are cast to f32 per tile;
    accumulation is f32; output is written back in the input dtype.  The concat
    is eliminated algebraically (W.T split into three chunks), so no (TB, 9)
    temporary is ever built.
    """
    acc = jnp.dot(o1_ref[...].astype(jnp.float32),
                  w1_ref[...].astype(jnp.float32),
                  preferred_element_type=jnp.float32)
    acc = acc + jnp.dot(o2_ref[...].astype(jnp.float32),
                        w2_ref[...].astype(jnp.float32),
                        preferred_element_type=jnp.float32)
    acc = acc + jnp.dot(o3_ref[...].astype(jnp.float32),
                        w3_ref[...].astype(jnp.float32),
                        preferred_element_type=jnp.float32)
    out_ref[...] = (acc + b_ref[...].astype(jnp.float32)).astype(out_ref.dtype)


def fused_cat_linear(out1: jax.Array, out2: jax.Array, out3: jax.Array,
                     w_fc: jax.Array, b_fc: jax.Array, *, tb: int = 128
                     ) -> jax.Array:
    """Pallas TPU equivalent of: fc(torch.cat([out1, out2, out3], dim=1)).

    out_i : (B, F_i) submodel outputs.
    w_fc  : (N_out, F1+F2+F3) torch Linear weight layout.
    b_fc  : (N_out,) bias.
    """
    b = out1.shape[0]
    f1, f2, f3 = out1.shape[1], out2.shape[1], out3.shape[1]
    n_out = w_fc.shape[0]
    assert w_fc.shape[1] == f1 + f2 + f3
    assert out2.shape[0] == b and out3.shape[0] == b

    # Pre-split W.T along the "input" axis so the concat never materializes.
    wt = w_fc.T                                  # (F1+F2+F3, N_out)
    w1 = wt[:f1]
    w2 = wt[f1:f1 + f2]
    w3 = wt[f1 + f2:]
    b2 = b_fc.reshape(1, n_out)

    # Batch tile: multiple of 8 (sublane rule), capped at the padded batch.
    tb = max(8, min(tb, _round_up(b, 8)))
    b_pad = _round_up(b, tb)
    if b_pad != b:
        pad = b_pad - b
        out1 = jnp.pad(out1, ((0, pad), (0, 0)))
        out2 = jnp.pad(out2, ((0, pad), (0, 0)))
        out3 = jnp.pad(out3, ((0, pad), (0, 0)))
    grid = (b_pad // tb,)

    def row_spec(f):
        return pl.BlockSpec((tb, f), lambda i: (i, 0))

    def full_spec(shape):
        return pl.BlockSpec(shape, lambda i: (0, 0))

    y = pl.pallas_call(
        _fusion_fc_kernel,
        out_shape=jax.ShapeDtypeStruct((b_pad, n_out), out1.dtype),
        grid=grid,
        in_specs=[
            row_spec(f1),                 # out1 tile (TB, F1)
            row_spec(f2),                 # out2 tile (TB, F2)
            row_spec(f3),                 # out3 tile (TB, F3)
            full_spec((f1, n_out)),       # W.T chunk 1 (resident)
            full_spec((f2, n_out)),       # W.T chunk 2 (resident)
            full_spec((f3, n_out)),       # W.T chunk 3 (resident)
            full_spec((1, n_out)),        # bias (resident)
        ],
        out_specs=pl.BlockSpec((tb, n_out), lambda i: (i, 0)),
        compiler_params=pltpu.CompilerParams(
            dimension_semantics=("parallel",)),  # batch tiles are independent
    )(out1, out2, out3, w1, w2, w3, b2)

    return y[:b]


def fusion_model_forward(x, model1, model2, model3, w_fc, b_fc):
    """Mirror of FusionModel.forward: run submodels, then fused cat + fc."""
    out1 = model1(x)
    out2 = model2(x)
    out3 = model3(x)
    return fused_cat_linear(out1, out2, out3, w_fc, b_fc, tb=8)


def _make_standin_model(key, in_dim, out_dim=3):
    # Simple linear stand-in for the unspecified submodels (plain JAX, not
    # part of the Pallas kernel).
    kw, kb = jax.random.split(key)
    w = jax.random.normal(kw, (in_dim, out_dim), jnp.float32) * 0.1
    bias = jax.random.normal(kb, (out_dim,), jnp.float32) * 0.1
    return lambda x: x @ w + bias


def _reference(out1, out2, out3, w_fc, b_fc):
    fused = jnp.concatenate([out1, out2, out3], axis=1)
    return fused @ w_fc.T + b_fc


if __name__ == "__main__":
    batch, in_dim = 16, 32

    key = jax.random.PRNGKey(0)
    kx, k1, k2, k3, kw, kb = jax.random.split(key, 6)

    x = jax.random.normal(kx, (batch, in_dim), dtype=jnp.float32)
    model1 = _make_standin_model(k1, in_dim)
    model2 = _make_standin_model(k2, in_dim)
    model3 = _make_standin_model(k3, in_dim)

    # fc = torch.nn.Linear(9, 3): weight (3, 9), bias (3,)
    w_fc = jax.random.normal(kw, (3, 9), dtype=jnp.float32) * 0.1
    b_fc = jax.random.normal(kb, (3,), dtype=jnp.float32) * 0.1

    y = fusion_model_forward(x, model1, model2, model3, w_fc, b_fc)
    y = jax.block_until_ready(y)

    ref = _reference(model1(x), model2(x), model3(x), w_fc, b_fc)
    assert y.shape == (batch, 3), y.shape
    assert jnp.allclose(y, ref, atol=1e-5, rtol=1e-5), (y, ref)

    print("KERNEL_OK")
</pallas_src>

<mosaic_0001>
module attributes {stable_mosaic.version = 11 : i64} {
  func.func @_fusion_fc_kernel(%arg0: i32, %arg1: memref<8x3xf32, #tpu.memory_space<vmem>>, %arg2: memref<8x3xf32, #tpu.memory_space<vmem>>, %arg3: memref<8x3xf32, #tpu.memory_space<vmem>>, %arg4: memref<3x3xf32, #tpu.memory_space<vmem>>, %arg5: memref<3x3xf32, #tpu.memory_space<vmem>>, %arg6: memref<3x3xf32, #tpu.memory_space<vmem>>, %arg7: memref<1x3xf32, #tpu.memory_space<vmem>>, %arg8: memref<8x3xf32, #tpu.memory_space<vmem>>) attributes {dimension_semantics = [#tpu.dimension_semantics<parallel>], iteration_bounds = array<i64: 2>, scalar_prefetch = 0 : i64, scratch_operands = 0 : i64, tpu.core_type = #tpu.core_type<tc>, window_params = [{transform_indices = @transform_0, window_bounds = array<i64: 8, 3>}, {transform_indices = @transform_1, window_bounds = array<i64: 8, 3>}, {transform_indices = @transform_2, window_bounds = array<i64: 8, 3>}, {pipeline_mode = #tpu.pipeline_mode<synchronous>, transform_indices = @transform_3, window_bounds = array<i64: 3, 3>}, {pipeline_mode = #tpu.pipeline_mode<synchronous>, transform_indices = @transform_4, window_bounds = array<i64: 3, 3>}, {pipeline_mode = #tpu.pipeline_mode<synchronous>, transform_indices = @transform_5, window_bounds = array<i64: 3, 3>}, {pipeline_mode = #tpu.pipeline_mode<synchronous>, transform_indices = @transform_6, window_bounds = array<i64: 1, 3>}, {transform_indices = @transform_7, window_bounds = array<i64: 8, 3>}]} {
    %c0 = arith.constant 0 : index
    %c0_0 = arith.constant 0 : index
    %0 = vector.load %arg1[%c0, %c0_0] : memref<8x3xf32, #tpu.memory_space<vmem>>, vector<8x3xf32>
    %c0_1 = arith.constant 0 : index
    %c0_2 = arith.constant 0 : index
    %1 = vector.load %arg4[%c0_1, %c0_2] : memref<3x3xf32, #tpu.memory_space<vmem>>, vector<3x3xf32>
    %cst = arith.constant dense<0.000000e+00> : vector<8x3xf32>
    %2 = tpu.matmul %0, %1, %cst {dimension_numbers = #tpu.dot_dimension_numbers<[1], [0], [0], [1], [0, 0, 1, 1], [], []>} : vector<8x3xf32>, vector<3x3xf32>, vector<8x3xf32> -> vector<8x3xf32>
    %c0_3 = arith.constant 0 : index
    %c0_4 = arith.constant 0 : index
    %3 = vector.load %arg2[%c0_3, %c0_4] : memref<8x3xf32, #tpu.memory_space<vmem>>, vector<8x3xf32>
    %c0_5 = arith.constant 0 : index
    %c0_6 = arith.constant 0 : index
    %4 = vector.load %arg5[%c0_5, %c0_6] : memref<3x3xf32, #tpu.memory_space<vmem>>, vector<3x3xf32>
    %cst_7 = arith.constant dense<0.000000e+00> : vector<8x3xf32>
    %5 = tpu.matmul %3, %4, %cst_7 {dimension_numbers = #tpu.dot_dimension_numbers<[1], [0], [0], [1], [0, 0, 1, 1], [], []>} : vector<8x3xf32>, vector<3x3xf32>, vector<8x3xf32> -> vector<8x3xf32>
    %6 = arith.addf %2, %5 : vector<8x3xf32>
    %c0_8 = arith.constant 0 : index
    %c0_9 = arith.constant 0 : index
    %7 = vector.load %arg3[%c0_8, %c0_9] : memref<8x3xf32, #tpu.memory_space<vmem>>, vector<8x3xf32>
    %c0_10 = arith.constant 0 : index
    %c0_11 = arith.constant 0 : index
    %8 = vector.load %arg6[%c0_10, %c0_11] : memref<3x3xf32, #tpu.memory_space<vmem>>, vector<3x3xf32>
    %cst_12 = arith.constant dense<0.000000e+00> : vector<8x3xf32>
    %9 = tpu.matmul %7, %8, %cst_12 {dimension_numbers = #tpu.dot_dimension_numbers<[1], [0], [0], [1], [0, 0, 1, 1], [], []>} : vector<8x3xf32>, vector<3x3xf32>, vector<8x3xf32> -> vector<8x3xf32>
    %10 = arith.addf %6, %9 : vector<8x3xf32>
    %c0_13 = arith.constant 0 : index
    %c0_14 = arith.constant 0 : index
    %11 = vector.load %arg7[%c0_13, %c0_14] : memref<1x3xf32, #tpu.memory_space<vmem>>, vector<1x3xf32>
    %12 = vector.broadcast %11 : vector<1x3xf32> to vector<8x3xf32>
    %13 = arith.addf %10, %12 : vector<8x3xf32>
    %c0_15 = arith.constant 0 : index
    %c0_16 = arith.constant 0 : index
    %14 = vector.load %arg8[%c0_15, %c0_16] : memref<8x3xf32, #tpu.memory_space<vmem>>, vector<8x3xf32>
    tpu.vector_store %arg8[%c0_15, %c0_16], %13 {strides = array<i32>} : memref<8x3xf32, #tpu.memory_space<vmem>>, vector<8x3xf32>,
    return
  }
  func.func @transform_0(%arg0: i32) -> (i32, i32) {
    %c0_i32 = arith.constant 0 : i32
    %c0_i32_0 = arith.constant 0 : i32
    return %arg0, %c0_i32 : i32, i32
  }
  func.func @transform_1(%arg0: i32) -> (i32, i32) {
    %c0_i32 = arith.constant 0 : i32
    %c0_i32_0 = arith.constant 0 : i32
    return %arg0, %c0_i32 : i32, i32
  }
  func.func @transform_2(%arg0: i32) -> (i32, i32) {
    %c0_i32 = arith.constant 0 : i32
    %c0_i32_0 = arith.constant 0 : i32
    return %arg0, %c0_i32 : i32, i32
  }
  func.func @transform_3(%arg0: i32) -> (i32, i32) {
    %c0_i32 = arith.constant 0 : i32
    %c0_i32_0 = arith.constant 0 : i32
    %c0_i32_1 = arith.constant 0 : i32
    return %c0_i32, %c0_i32_0 : i32, i32
  }
  func.func @transform_4(%arg0: i32) -> (i32, i32) {
    %c0_i32 = arith.constant 0 : i32
    %c0_i32_0 = arith.constant 0 : i32
    %c0_i32_1 = arith.constant 0 : i32
    return %c0_i32, %c0_i32_0 : i32, i32
  }
  func.func @transform_5(%arg0: i32) -> (i32, i32) {
    %c0_i32 = arith.constant 0 : i32
    %c0_i32_0 = arith.constant 0 : i32
    %c0_i32_1 = arith.constant 0 : i32
    return %c0_i32, %c0_i32_0 : i32, i32
  }
  func.func @transform_6(%arg0: i32) -> (i32, i32) {
    %c0_i32 = arith.constant 0 : i32
    %c0_i32_0 = arith.constant 0 : i32
    %c0_i32_1 = arith.constant 0 : i32
    return %c0_i32, %c0_i32_0 : i32, i32
  }
  func.func @transform_7(%arg0: i32) -> (i32, i32) {
    %c0_i32 = arith.constant 0 : i32
    %c0_i32_0 = arith.constant 0 : i32
    return %arg0, %c0_i32 : i32, i32
  }
}

</mosaic_0001>

<llo_original>
// kernel: tpu_custom_call.1
$region0: #{tpu_custom_call.1}
  #allocation0 [shape = 'u32[]', space=smem, size = 0x4, offset = 0x4, fixed_abs, tag = 'smem constant byte address 0x4 - core index']
  #allocation1 [shape = 'u32[144,128]{1,0:T(1,128)}', space=vmem, size = 0x12000, scoped, tag = 'internal scratch']
  %s0 = inlined_call_operand.vmem [shape: f32[16,3], index: 0, kind: input, shape index: {}]
  %s1 = inlined_call_operand.vmem [shape: f32[16,3], index: 1, kind: input, shape index: {}]
  %s2 = inlined_call_operand.vmem [shape: f32[16,3], index: 2, kind: input, shape index: {}]
  %s3 = inlined_call_operand.vmem [shape: f32[3,3], index: 3, kind: input, shape index: {}]
  %s4 = inlined_call_operand.vmem [shape: f32[3,3], index: 4, kind: input, shape index: {}]
  %s5 = inlined_call_operand.vmem [shape: f32[3,3], index: 5, kind: input, shape index: {}]
  %s6 = inlined_call_operand.vmem [shape: f32[1,3], index: 6, kind: input, shape index: {}]
  %s7 = inlined_call_operand.vmem [shape: f32[16,3], index: 7, kind: output, shape index: {}]
  %s8 = sld [smem:[#allocation0]]
  $region61: #{tpu_custom_call.1} parent=0
    _
  %s10 = ssub.s32 1, %s8
  %s11 = scalar_select 0, %s10, %s8
  loop: start=0, step=1, limit=4
  $region2: #{tpu_custom_call.1} parent=0 // loop_pre_header
    _
  $region3: #{tpu_custom_call.1} parent=0 // loop_header
    %s13 = sphi 0, %s17
    %p14 = scmp.ge.s32.totalorder %s13, 4
    %s23 = sphi 0, %s25
    %s26 = sphi 0, %s23
    %s27 = sphi 0, %s26
    %s43 = sphi 0, %s27
    %s49 = sphi 0, %s51
    %s52 = sphi 0, %s49
    %s53 = sphi 0, %s52
    %s69 = sphi 0, %s53
    %s75 = sphi 0, %s77
    %s78 = sphi 0, %s75
    %s79 = sphi 0, %s78
    %s95 = sphi 0, %s79
    %s99 = sphi 0, %s99
    %s101 = sphi 0, %s99
    %s102 = sphi 0, %s101
    %s116 = sphi 0, %s102
    %s120 = sphi 0, %s120
    %s122 = sphi 0, %s120
    %s123 = sphi 0, %s122
    %s137 = sphi 0, %s123
    %s141 = sphi 0, %s141
    %s143 = sphi 0, %s141
    %s144 = sphi 0, %s143
    %s158 = sphi 0, %s144
    %s162 = sphi 0, %s162
    %s164 = sphi 0, %s162
    %s165 = sphi 0, %s164
    %s179 = sphi 0, %s165
    %s185 = sphi 0, %s187
    %s188 = sphi 0, %s185
    %s189 = sphi 0, %s188
    %s205 = sphi 0, %s189
  $region4: #{tpu_custom_call.1} parent=0 // loop_header_branch
    %16 = sbr.rel (%p14) target = $region8
  $region5: #{tpu_custom_call.1} parent=0 // loop_body
    %s18 = ssub.s32 %s13, 1
    %s19 = ssub.s32 %s13, 2
    %s20 = sadd.s32 %s13, 1
    %s21 = ssub.s32 %s13, %s20
    %p22 = scmp.eq.s32.totalorder %s21, 0
    %s24 = sadd.s32 %s23, 1
    %s25 = scalar_select %p22, %s23, %s24
    %p28 = pneg %p22
    %p29 = scmp.eq.s32.totalorder %s13, 1
    %p30 = por %p28, %p29
    %p31 = scmp.ne.s32.totalorder %s23, %s26
    %p32 = scmp.eq.s32.totalorder %s13, 0
    %p33 = por %p31, %p32
    %p34 = scmp.ne.s32.totalorder %s23, %s26
    %p35 = scmp.eq.s32.totalorder %s18, 1
    %p36 = por %p34, %p35
    %p37 = scmp.ne.s32.totalorder %s26, %s27
    %p38 = scmp.eq.s32.totalorder %s18, 0
    %p39 = por %p37, %p38
    %p40 = scmp.ne.s32.totalorder %s26, %s27
    %p41 = scmp.eq.s32.totalorder %s19, 1
    %p42 = por %p40, %p41
    %p44 = scmp.ne.s32.totalorder %s27, %s43
    %p45 = scmp.eq.s32.totalorder %s19, 0
    %p46 = por %p44, %p45
    %s47 = ssub.s32 %s13, %s20
    %p48 = scmp.eq.s32.totalorder %s47, 0
    %s50 = sadd.s32 %s49, 1
    %s51 = scalar_select %p48, %s49, %s50
    %p54 = pneg %p48
    %p55 = scmp.eq.s32.totalorder %s13, 1
    %p56 = por %p54, %p55
    %p57 = scmp.ne.s32.totalorder %s49, %s52
    %p58 = scmp.eq.s32.totalorder %s13, 0
    %p59 = por %p57, %p58
    %p60 = scmp.ne.s32.totalorder %s49, %s52
    %p61 = scmp.eq.s32.totalorder %s18, 1
    %p62 = por %p60, %p61
    %p63 = scmp.ne.s32.totalorder %s52, %s53
    %p64 = scmp.eq.s32.totalorder %s18, 0
    %p65 = por %p63, %p64
    %p66 = scmp.ne.s32.totalorder %s52, %s53
    %p67 = scmp.eq.s32.totalorder %s19, 1
    %p68 = por %p66, %p67
    %p70 = scmp.ne.s32.totalorder %s53, %s69
    %p71 = scmp.eq.s32.totalorder %s19, 0
    %p72 = por %p70, %p71
    %s73 = ssub.s32 %s13, %s20
    %p74 = scmp.eq.s32.totalorder %s73, 0
    %s76 = sadd.s32 %s75, 1
    %s77 = scalar_select %p74, %s75, %s76
    %p80 = pneg %p74
    %p81 = scmp.eq.s32.totalorder %s13, 1
    %p82 = por %p80, %p81
    %p83 = scmp.ne.s32.totalorder %s75, %s78
    %p84 = scmp.eq.s32.totalorder %s13, 0
    %p85 = por %p83, %p84
    %p86 = scmp.ne.s32.totalorder %s75, %s78
    %p87 = scmp.eq.s32.totalorder %s18, 1
    %p88 = por %p86, %p87
    %p89 = scmp.ne.s32.totalorder %s78, %s79
    %p90 = scmp.eq.s32.totalorder %s18, 0
    %p91 = por %p89, %p90
    %p92 = scmp.ne.s32.totalorder %s78, %s79
    %p93 = scmp.eq.s32.totalorder %s19, 1
    %p94 = por %p92, %p93
    %p96 = scmp.ne.s32.totalorder %s79, %s95
    %p97 = scmp.eq.s32.totalorder %s19, 0
    %p98 = por %p96, %p97
    %s100 = sadd.s32 %s99, 1
    %p103 = scmp.eq.s32.totalorder %s13, 1
    %p104 = scmp.ne.s32.totalorder %s99, %s101
    %p105 = scmp.eq.s32.totalorder %s13, 0
    %p106 = por %p104, %p105
    %p107 = scmp.ne.s32.totalorder %s99, %s101
    %p108 = scmp.eq.s32.totalorder %s18, 1
    %p109 = por %p107, %p108
    %p110 = scmp.ne.s32.totalorder %s101, %s102
    %p111 = scmp.eq.s32.totalorder %s18, 0
    %p112 = por %p110, %p111
    %p113 = scmp.ne.s32.totalorder %s101, %s102
    %p114 = scmp.eq.s32.totalorder %s19, 1
    %p115 = por %p113, %p114
    %p117 = scmp.ne.s32.totalorder %s102, %s116
    %p118 = scmp.eq.s32.totalorder %s19, 0
    %p119 = por %p117, %p118
    %s121 = sadd.s32 %s120, 1
    %p124 = scmp.eq.s32.totalorder %s13, 1
    %p125 = scmp.ne.s32.totalorder %s120, %s122
    %p126 = scmp.eq.s32.totalorder %s13, 0
    %p127 = por %p125, %p126
    %p128 = scmp.ne.s32.totalorder %s120, %s122
    %p129 = scmp.eq.s32.totalorder %s18, 1
    %p130 = por %p128, %p129
    %p131 = scmp.ne.s32.totalorder %s122, %s123
    %p132 = scmp.eq.s32.totalorder %s18, 0
    %p133 = por %p131, %p132
    %p134 = scmp.ne.s32.totalorder %s122, %s123
    %p135 = scmp.eq.s32.totalorder %s19, 1
    %p136 = por %p134, %p135
    %p138 = scmp.ne.s32.totalorder %s123, %s137
    %p139 = scmp.eq.s32.totalorder %s19, 0
    %p140 = por %p138, %p139
    %s142 = sadd.s32 %s141, 1
    %p145 = scmp.eq.s32.totalorder %s13, 1
    %p146 = scmp.ne.s32.totalorder %s141, %s143
    %p147 = scmp.eq.s32.totalorder %s13, 0
    %p148 = por %p146, %p147
    %p149 = scmp.ne.s32.totalorder %s141, %s143
    %p150 = scmp.eq.s32.totalorder %s18, 1
    %p151 = por %p149, %p150
    %p152 = scmp.ne.s32.totalorder %s143, %s144
    %p153 = scmp.eq.s32.totalorder %s18, 0
    %p154 = por %p152, %p153
    %p155 = scmp.ne.s32.totalorder %s143, %s144
    %p156 = scmp.eq.s32.totalorder %s19, 1
    %p157 = por %p155, %p156
    %p159 = scmp.ne.s32.totalorder %s144, %s158
    %p160 = scmp.eq.s32.totalorder %s19, 0
    %p161 = por %p159, %p160
    %s163 = sadd.s32 %s162, 1
    %p166 = scmp.eq.s32.totalorder %s13, 1
    %p167 = scmp.ne.s32.totalorder %s162, %s164
    %p168 = scmp.eq.s32.totalorder %s13, 0
    %p169 = por %p167, %p168
    %p170 = scmp.ne.s32.totalorder %s162, %s164
    %p171 = scmp.eq.s32.totalorder %s18, 1
    %p172 = por %p170, %p171
    %p173 = scmp.ne.s32.totalorder %s164, %s165
    %p174 = scmp.eq.s32.totalorder %s18, 0
    %p175 = por %p173, %p174
    %p176 = scmp.ne.s32.totalorder %s164, %s165
    %p177 = scmp.eq.s32.totalorder %s19, 1
    %p178 = por %p176, %p177
    %p180 = scmp.ne.s32.totalorder %s165, %s179
    %p181 = scmp.eq.s32.totalorder %s19, 0
    %p182 = por %p180, %p181
    %s183 = ssub.s32 %s13, %s20
    %p184 = scmp.eq.s32.totalorder %s183, 0
    %s186 = sadd.s32 %s185, 1
    %s187 = scalar_select %p184, %s185, %s186
    %p190 = pneg %p184
    %p191 = scmp.eq.s32.totalorder %s13, 1
    %p192 = por %p190, %p191
    %p193 = scmp.ne.s32.totalorder %s185, %s188
    %p194 = scmp.eq.s32.totalorder %s13, 0
    %p195 = por %p193, %p194
    %p196 = scmp.ne.s32.totalorder %s185, %s188
    %p197 = scmp.eq.s32.totalorder %s18, 1
    %p198 = por %p196, %p197
    %p199 = scmp.ne.s32.totalorder %s188, %s189
    %p200 = scmp.eq.s32.totalorder %s18, 0
    %p201 = por %p199, %p200
    %p202 = scmp.ne.s32.totalorder %s188, %s189
    %p203 = scmp.eq.s32.totalorder %s19, 1
    %p204 = por %p202, %p203
    %p206 = scmp.ne.s32.totalorder %s189, %s205
    %p207 = scmp.eq.s32.totalorder %s19, 0
    %p208 = por %p206, %p207
    %p209 = scmp.le.s32.totalorder 1, %s13
    %p210 = scmp.lt.s32.totalorder %s13, 3
    %p211 = pnand %p209, %p210
    %p212 = pneg %p211
    // Predicated region
    $region9: #{tpu_custom_call.1} parent=5 // pred_check
      _
    $region10: #{tpu_custom_call.1} parent=5 // pred_check_branch
      %214 = sbr.rel (%p211) target = $region12
    $region11: #{tpu_custom_call.1} parent=5 // pred_region
      %s215 = ssub.s32 %s13, 1
      // Predicated region
      $region13: #{tpu_custom_call.1} parent=11 // pred_check
        %p216 = pneg %p112
      $region14: #{tpu_custom_call.1} parent=11 // pred_check_branch
        %218 = sbr.rel (%p216) target = $region16
      $region15: #{tpu_custom_call.1} parent=11 // pred_region
        _
      $region16: #{tpu_custom_call.1} parent=11 // pred_fallthru
        _
      // Predicated region
      $region17: #{tpu_custom_call.1} parent=11 // pred_check
        %p219 = pneg %p133
      $region18: #{tpu_custom_call.1} parent=11 // pred_check_branch
        %221 = sbr.rel (%p219) target = $region20
      $region19: #{tpu_custom_call.1} parent=11 // pred_region
        _
      $region20: #{tpu_custom_call.1} parent=11 // pred_fallthru
        _
      // Predicated region
      $region21: #{tpu_custom_call.1} parent=11 // pred_check
        %p222 = pneg %p154
      $region22: #{tpu_custom_call.1} parent=11 // pred_check_branch
        %224 = sbr.rel (%p222) target = $region24
      $region23: #{tpu_custom_call.1} parent=11 // pred_region
        _
      $region24: #{tpu_custom_call.1} parent=11 // pred_fallthru
        _
      // Predicated region
      $region25: #{tpu_custom_call.1} parent=11 // pred_check
        %p225 = pneg %p175
      $region26: #{tpu_custom_call.1} parent=11 // pred_check_branch
        %227 = sbr.rel (%p225) target = $region28
      $region27: #{tpu_custom_call.1} parent=11 // pred_region
        _
      $region28: #{tpu_custom_call.1} parent=11 // pred_fallthru
        _
    $region12: #{tpu_custom_call.1} parent=5 // pred_fallthru
      _
    %p228 = scmp.lt.s32.totalorder %s13, 2
    // Predicated region
    $region29: #{tpu_custom_call.1} parent=5 // pred_check
      %p229 = pneg %p228
    $region30: #{tpu_custom_call.1} parent=5 // pred_check_branch
      %231 = sbr.rel (%p229) target = $region32
    $region31: #{tpu_custom_call.1} parent=5 // pred_region
      // Predicated region
      $region33: #{tpu_custom_call.1} parent=31 // pred_check
        %p232 = pneg %p33
      $region34: #{tpu_custom_call.1} parent=31 // pred_check_branch
        %234 = sbr.rel (%p232) target = $region36
      $region35: #{tpu_custom_call.1} parent=31 // pred_region
        %p235 = scmp.lt.s32.totalorder %s13, 1
        %s236 = scalar_select %p235, %s13, 1
        %s237 = smul.addr %s236, 8
        %s238 = scalar_lea.vmem %s0, %s237
      $region36: #{tpu_custom_call.1} parent=31 // pred_fallthru
        _
      // Predicated region
      $region37: #{tpu_custom_call.1} parent=31 // pred_check
        %p239 = pneg %p59
      $region38: #{tpu_custom_call.1} parent=31 // pred_check_branch
        %241 = sbr.rel (%p239) target = $region40
      $region39: #{tpu_custom_call.1} parent=31 // pred_region
        %p242 = scmp.lt.s32.totalorder %s13, 1
        %s243 = scalar_select %p242, %s13, 1
        %s244 = smul.addr %s243, 8
        %s245 = scalar_lea.vmem %s1, %s244
      $region40: #{tpu_custom_call.1} parent=31 // pred_fallthru
        _
      // Predicated region
      $region41: #{tpu_custom_call.1} parent=31 // pred_check
        %p246 = pneg %p85
      $region42: #{tpu_custom_call.1} parent=31 // pred_check_branch
        %248 = sbr.rel (%p246) target = $region44
      $region43: #{tpu_custom_call.1} parent=31 // pred_region
        %p249 = scmp.lt.s32.totalorder %s13, 1
        %s250 = scalar_select %p249, %s13, 1
        %s251 = smul.addr %s250, 8
        %s252 = scalar_lea.vmem %s2, %s251
      $region44: #{tpu_custom_call.1} parent=31 // pred_fallthru
        _
    $region32: #{tpu_custom_call.1} parent=5 // pred_fallthru
      _
    %p253 = scmp.le.s32.totalorder 1, %s13
    %p254 = scmp.lt.s32.totalorder %s13, 3
    %p255 = pnand %p253, %p254
    %p256 = pneg %p255
    // Predicated region
    $region45: #{tpu_custom_call.1} parent=5 // pred_check
      _
    $region46: #{tpu_custom_call.1} parent=5 // pred_check_branch
      %258 = sbr.rel (%p255) target = $region48
    $region47: #{tpu_custom_call.1} parent=5 // pred_region
      %s259 = ssub.s32 %s13, 1
      %p260 = scmp.lt.s32.totalorder %s18, 1
      %s261 = scalar_select %p260, %s18, 1
      %s262 = smul.addr %s261, 8
      %s263 = scalar_lea.vmem %s0, %s262
      %p264 = pneg %p39
      %p265 = pneg %p36
      %p266 = scmp.lt.s32.totalorder %s18, 1
      %s267 = scalar_select %p266, %s18, 1
      %s268 = smul.addr %s267, 8
      %s269 = scalar_lea.vmem %s1, %s268
      %p270 = pneg %p65
      %p271 = pneg %p62
      %p272 = scmp.lt.s32.totalorder %s18, 1
      %s273 = scalar_select %p272, %s18, 1
      %s274 = smul.addr %s273, 8
      %s275 = scalar_lea.vmem %s2, %s274
      %p276 = pneg %p91
      %p277 = pneg %p88
      %p278 = pneg %p112
      %p279 = pneg %p109
      %p280 = pneg %p133
      %p281 = pneg %p130
      %p282 = pneg %p154
      %p283 = pneg %p151
      %p284 = pneg %p175
      %p285 = pneg %p172
      %p286 = pneg %p201
      %p287 = pneg %p198
      %p288 = scmp.lt.s32.totalorder %s18, 1
      %s289 = scalar_select %p288, %s18, 1
      %s290 = smul.addr %s289, 8
      %s291 = scalar_lea.vmem %s7, %s290
      %p292 = scmp.lt.s32.totalorder %s18, 1
      %s293 = scalar_select %p292, %s18, 1
      %s294 = smul.addr %s293, 8
      %s295 = scalar_lea.vmem %s0, %s294
      %p296 = scmp.lt.s32.totalorder %s18, 1
      %s297 = scalar_select %p296, %s18, 1
      %s298 = smul.addr %s297, 8
      %s299 = scalar_lea.vmem %s1, %s298
      %p300 = scmp.lt.s32.totalorder %s18, 1
      %s301 = scalar_select %p300, %s18, 1
      %s302 = smul.addr %s301, 8
      %s303 = scalar_lea.vmem %s2, %s302
      %p304 = scmp.lt.s32.totalorder %s18, 1
      %s305 = scalar_select %p304, %s18, 1
      %s306 = smul.addr %s305, 8
      %s307 = scalar_lea.vmem %s7, %s306
      %v308 = vld [vmem:[%s295] sm:$0xff]
      %v309 = vld [vmem:[%s3] sm:$0x7]
      %v310 = vld [vmem:[%s299] sm:$0xff]
      %v311 = vld [vmem:[%s4] sm:$0x7]
      %vm312 = vcmask 23552
      %v314 = vsel %vm312, %v310, 0
      %vm316 = vcmask 1042432
      %v318 = vsel %vm316, %v311, 0
      %320 = vmatprep.subr.mxu0 0.0
      %321 = vmatpush1.msra.mxu0 %v318
      %322 = vmatprep.subr.mxu0 0.0
      %323 = vmatpush1.msra.mxu0 0.0
      %324 = vmatprep.subr.mxu0 0.0
      %325 = vmatpush1.msra.mxu0 0.0
      %326 = vmatprep.subr.mxu0 0.0
      %327 = vmatpush1.msra.mxu0 0.0
      %328 = vmatprep.subr.mxu0 0.0
      %329 = vmatpush1.msra.mxu0 0.0
      %330 = vmatprep.subr.mxu0 0.0
      %331 = vmatpush1.msra.mxu0 0.0
      %332 = vmatprep.subr.mxu0 0.0
      %333 = vmatpush1.msra.mxu0 0.0
      %334 = vmatprep.subr.mxu0 0.0
      %335 = vmatpush1.msra.mxu0 0.0
      %336 = vmatprep.subr.mxu0 0.0
      %337 = vmatpush1.msra.mxu0 0.0
      %338 = vmatprep.subr.mxu0 0.0
      %339 = vmatpush1.msra.mxu0 0.0
      %340 = vmatprep.subr.mxu0 0.0
      %341 = vmatpush1.msra.mxu0 0.0
      %342 = vmatprep.subr.mxu0 0.0
      %343 = vmatpush1.msra.mxu0 0.0
      %344 = vmatprep.subr.mxu0 0.0
      %345 = vmatpush1.msra.mxu0 0.0
      %346 = vmatprep.subr.mxu0 0.0
      %347 = vmatpush1.msra.mxu0 0.0
      %348 = vmatprep.subr.mxu0 0.0
      %349 = vmatpush1.msra.mxu0 0.0
      %350 = vmatprep.subr.mxu0 0.0
      %351 = vmatpush1.msra.mxu0 0.0
      %352 = vmatprep.subr.mxu0 0.0
      %353 = vmatpush1.msra.mxu0 0.0
      %354 = vmatprep.subr.mxu0 0.0
      %355 = vmatpush1.msra.mxu0 0.0
      %356 = vmatprep.subr.mxu0 0.0
      %357 = vmatpush1.msra.mxu0 0.0
      %358 = vmatprep.subr.mxu0 0.0
      %359 = vmatpush1.msra.mxu0 0.0
      %360 = vmatprep.subr.mxu0 0.0
      %361 = vmatpush1.msra.mxu0 0.0
      %362 = vmatprep.subr.mxu0 0.0
      %363 = vmatpush1.msra.mxu0 0.0
      %364 = vmatprep.subr.mxu0 0.0
      %365 = vmatpush1.msra.mxu0 0.0
      %366 = vmatprep.subr.mxu0 0.0
      %367 = vmatpush1.msra.mxu0 0.0
      %368 = vmatprep.subr.mxu0 0.0
      %369 = vmatpush1.msra.mxu0 0.0
      %370 = vmatprep.subr.mxu0 0.0
      %371 = vmatpush1.msra.mxu0 0.0
      %372 = vmatprep.subr.mxu0 0.0
      %373 = vmatpush1.msra.mxu0 0.0
      %374 = vmatprep.subr.mxu0 0.0
      %375 = vmatpush1.msra.mxu0 0.0
      %376 = vmatprep.subr.mxu0 0.0
      %377 = vmatpush1.msra.mxu0 0.0
      %378 = vmatprep.subr.mxu0 0.0
      %379 = vmatpush1.msra.mxu0 0.0
      %380 = vmatprep.subr.mxu0 0.0
      %381 = vmatpush1.msra.mxu0 0.0
      %382 = vmatprep.subr.mxu0 0.0
      %383 = vmatpush1.msra.mxu0 0.0
      %384 = vmatprep.mubr.f32.mxu0 0.0
      %385 = vmatmul.mubr.f32.gmra.mrb[0].mxu0 %v314
      %v386 = vpop.f32.mrb[0].mxu0
      %v387 = vadd.f32 0.0, %v386
      %v388 = vpop.f32.mrb[0].mxu0
      %389 = vdwg.mxu0
      %v391 = vsel %vm312, %v308, 0
      %v394 = vsel %vm316, %v309, 0
      %396 = vmatprep.subr.mxu0 0.0
      %397 = vmatpush1.msra.mxu0 %v394
      %398 = vmatprep.subr.mxu0 0.0
      %399 = vmatpush1.msra.mxu0 0.0
      %400 = vmatprep.subr.mxu0 0.0
      %401 = vmatpush1.msra.mxu0 0.0
      %402 = vmatprep.subr.mxu0 0.0
      %403 = vmatpush1.msra.mxu0 0.0
      %404 = vmatprep.subr.mxu0 0.0
      %405 = vmatpush1.msra.mxu0 0.0
      %406 = vmatprep.subr.mxu0 0.0
      %407 = vmatpush1.msra.mxu0 0.0
      %408 = vmatprep.subr.mxu0 0.0
      %409 = vmatpush1.msra.mxu0 0.0
      %410 = vmatprep.subr.mxu0 0.0
      %411 = vmatpush1.msra.mxu0 0.0
      %412 = vmatprep.subr.mxu0 0.0
      %413 = vmatpush1.msra.mxu0 0.0
      %414 = vmatprep.subr.mxu0 0.0
      %415 = vmatpush1.msra.mxu0 0.0
      %416 = vmatprep.subr.mxu0 0.0
      %417 = vmatpush1.msra.mxu0 0.0
      %418 = vmatprep.subr.mxu0 0.0
      %419 = vmatpush1.msra.mxu0 0.0
      %420 = vmatprep.subr.mxu0 0.0
      %421 = vmatpush1.msra.mxu0 0.0
      %422 = vmatprep.subr.mxu0 0.0
      %423 = vmatpush1.msra.mxu0 0.0
      %424 = vmatprep.subr.mxu0 0.0
      %425 = vmatpush1.msra.mxu0 0.0
      %426 = vmatprep.subr.mxu0 0.0
      %427 = vmatpush1.msra.mxu0 0.0
      %428 = vmatprep.subr.mxu0 0.0
      %429 = vmatpush1.msra.mxu0 0.0
      %430 = vmatprep.subr.mxu0 0.0
      %431 = vmatpush1.msra.mxu0 0.0
      %432 = vmatprep.subr.mxu0 0.0
      %433 = vmatpush1.msra.mxu0 0.0
      %434 = vmatprep.subr.mxu0 0.0
      %435 = vmatpush1.msra.mxu0 0.0
      %436 = vmatprep.subr.mxu0 0.0
      %437 = vmatpush1.msra.mxu0 0.0
      %438 = vmatprep.subr.mxu0 0.0
      %439 = vmatpush1.msra.mxu0 0.0
      %440 = vmatprep.subr.mxu0 0.0
      %441 = vmatpush1.msra.mxu0 0.0
      %442 = vmatprep.subr.mxu0 0.0
      %443 = vmatpush1.msra.mxu0 0.0
      %444 = vmatprep.subr.mxu0 0.0
      %445 = vmatpush1.msra.mxu0 0.0
      %446 = vmatprep.subr.mxu0 0.0
      %447 = vmatpush1.msra.mxu0 0.0
      %448 = vmatprep.subr.mxu0 0.0
      %449 = vmatpush1.msra.mxu0 0.0
      %450 = vmatprep.subr.mxu0 0.0
      %451 = vmatpush1.msra.mxu0 0.0
      %452 = vmatprep.subr.mxu0 0.0
      %453 = vmatpush1.msra.mxu0 0.0
      %454 = vmatprep.subr.mxu0 0.0
      %455 = vmatpush1.msra.mxu0 0.0
      %456 = vmatprep.subr.mxu0 0.0
      %457 = vmatpush1.msra.mxu0 0.0
      %458 = vmatprep.subr.mxu0 0.0
      %459 = vmatpush1.msra.mxu0 0.0
      %460 = vmatprep.mubr.f32.mxu0 0.0
      %461 = vmatmul.mubr.f32.gmra.mrb[0].mxu0 %v391
      %v462 = vpop.f32.mrb[0].mxu0
      %v463 = vadd.f32 %v387, %v462
      %v464 = vpop.f32.mrb[0].mxu0
      %465 = vdwg.mxu0
      %v466 = vld [vmem:[%s303] sm:$0xff]
      %v467 = vld [vmem:[%s5] sm:$0x7]
      %v469 = vsel %vm312, %v466, 0
      %v472 = vsel %vm316, %v467, 0
      %474 = vmatprep.subr.mxu0 0.0
      %475 = vmatpush1.msra.mxu0 %v472
      %476 = vmatprep.subr.mxu0 0.0
      %477 = vmatpush1.msra.mxu0 0.0
      %478 = vmatprep.subr.mxu0 0.0
      %479 = vmatpush1.msra.mxu0 0.0
      %480 = vmatprep.subr.mxu0 0.0
      %481 = vmatpush1.msra.mxu0 0.0
      %482 = vmatprep.subr.mxu0 0.0
      %483 = vmatpush1.msra.mxu0 0.0
      %484 = vmatprep.subr.mxu0 0.0
      %485 = vmatpush1.msra.mxu0 0.0
      %486 = vmatprep.subr.mxu0 0.0
      %487 = vmatpush1.msra.mxu0 0.0
      %488 = vmatprep.subr.mxu0 0.0
      %489 = vmatpush1.msra.mxu0 0.0
      %490 = vmatprep.subr.mxu0 0.0
      %491 = vmatpush1.msra.mxu0 0.0
      %492 = vmatprep.subr.mxu0 0.0
      %493 = vmatpush1.msra.mxu0 0.0
      %494 = vmatprep.subr.mxu0 0.0
      %495 = vmatpush1.msra.mxu0 0.0
      %496 = vmatprep.subr.mxu0 0.0
      %497 = vmatpush1.msra.mxu0 0.0
      %498 = vmatprep.subr.mxu0 0.0
      %499 = vmatpush1.msra.mxu0 0.0
      %500 = vmatprep.subr.mxu0 0.0
      %501 = vmatpush1.msra.mxu0 0.0
      %502 = vmatprep.subr.mxu0 0.0
      %503 = vmatpush1.msra.mxu0 0.0
      %504 = vmatprep.subr.mxu0 0.0
      %505 = vmatpush1.msra.mxu0 0.0
      %506 = vmatprep.subr.mxu0 0.0
      %507 = vmatpush1.msra.mxu0 0.0
      %508 = vmatprep.subr.mxu0 0.0
      %509 = vmatpush1.msra.mxu0 0.0
      %510 = vmatprep.subr.mxu0 0.0
      %511 = vmatpush1.msra.mxu0 0.0
      %512 = vmatprep.subr.mxu0 0.0
      %513 = vmatpush1.msra.mxu0 0.0
      %514 = vmatprep.subr.mxu0 0.0
      %515 = vmatpush1.msra.mxu0 0.0
      %516 = vmatprep.subr.mxu0 0.0
      %517 = vmatpush1.msra.mxu0 0.0
      %518 = vmatprep.subr.mxu0 0.0
      %519 = vmatpush1.msra.mxu0 0.0
      %520 = vmatprep.subr.mxu0 0.0
      %521 = vmatpush1.msra.mxu0 0.0
      %522 = vmatprep.subr.mxu0 0.0
      %523 = vmatpush1.msra.mxu0 0.0
      %524 = vmatprep.subr.mxu0 0.0
      %525 = vmatpush1.msra.mxu0 0.0
      %526 = vmatprep.subr.mxu0 0.0
      %527 = vmatpush1.msra.mxu0 0.0
      %528 = vmatprep.subr.mxu0 0.0
      %529 = vmatpush1.msra.mxu0 0.0
      %530 = vmatprep.subr.mxu0 0.0
      %531 = vmatpush1.msra.mxu0 0.0
      %532 = vmatprep.subr.mxu0 0.0
      %533 = vmatpush1.msra.mxu0 0.0
      %534 = vmatprep.subr.mxu0 0.0
      %535 = vmatpush1.msra.mxu0 0.0
      %536 = vmatprep.subr.mxu0 0.0
      %537 = vmatpush1.msra.mxu0 0.0
      %538 = vmatprep.mubr.f32.mxu0 0.0
      %539 = vmatmul.mubr.f32.gmra.mrb[0].mxu0 %v469
      %v540 = vpop.f32.mrb[0].mxu0
      %v541 = vadd.f32 0.0, %v540
      %v542 = vpop.f32.mrb[0].mxu0
      %543 = vdwg.mxu0
      %v544 = vadd.f32 %v463, %v541
      %v545 = vld [vmem:[%s6] sm:$0x1]
      %v547 = vlaneseq
      %v548 = vshrl.u32 %v547, 7
      %v549 = vsub.s32 0, %v548
      %v550 = vrot.slane %v545, %v549
      %v552 = vadd.f32 %v544, %v550
      %553 = vst.msk [vmem:[%s307] sm:$0xff] %vm312, %v552
      %p554 = scmp.lt.s32.totalorder %s18, 1
      %s555 = scalar_select %p554, %s18, 1
      %s556 = smul.addr %s555, 8
      %s557 = scalar_lea.vmem %s7, %s556
      // Predicated region
      $region49: #{tpu_custom_call.1} parent=47 // pred_check
        %p558 = pneg %p198
      $region50: #{tpu_custom_call.1} parent=47 // pred_check_branch
        %560 = sbr.rel (%p558) target = $region52
      $region51: #{tpu_custom_call.1} parent=47 // pred_region
        _
      $region52: #{tpu_custom_call.1} parent=47 // pred_fallthru
        _
    $region48: #{tpu_custom_call.1} parent=5 // pred_fallthru
      _
    %p561 = scmp.le.s32.totalorder 2, %s13
    // Predicated region
    $region53: #{tpu_custom_call.1} parent=5 // pred_check
      %p562 = pneg %p561
    $region54: #{tpu_custom_call.1} parent=5 // pred_check_branch
      %564 = sbr.rel (%p562) target = $region56
    $region55: #{tpu_custom_call.1} parent=5 // pred_region
      %s565 = ssub.s32 %s13, 2
      // Predicated region
      $region57: #{tpu_custom_call.1} parent=55 // pred_check
        %p566 = pneg %p204
      $region58: #{tpu_custom_call.1} parent=55 // pred_check_branch
        %568 = sbr.rel (%p566) target = $region60
      $region59: #{tpu_custom_call.1} parent=55 // pred_region
        %p569 = scmp.lt.s32.totalorder %s19, 1
        %s570 = scalar_select %p569, %s19, 1
        %s571 = smul.addr %s570, 8
        %s572 = scalar_lea.vmem %s7, %s571
      $region60: #{tpu_custom_call.1} parent=55 // pred_fallthru
        _
    $region56: #{tpu_custom_call.1} parent=5 // pred_fallthru
      _
  $region6: #{tpu_custom_call.1} parent=0 // loop_footer
    %s17 = sadd.s32 1, %s13
  $region7: #{tpu_custom_call.1} parent=0 // loop_footer_branch
    %12 = sbr.rel target = $region3
  $region8: #{tpu_custom_call.1} parent=0 // loop_exit
    _

</llo_original>
